<compile_context>
chip_gen: v7x
topology: tpu7x:2x2x1
jax: 0.10.0
libtpu: 0.0.40
codegen_flags: <defaults>
</compile_context>

<pallas_src>
import functools

import jax
import jax.numpy as jnp
from jax.experimental import pallas as pl
from jax.experimental.pallas import tpu as pltpu


def _fast_coverage_kernel(xp_ref, wt_ref, o_ref, *, H, W, C, K, dil):
    """One batch image.

    xp_ref: (1, Hp, Wp*C) zero-padded channels-last slab, Hp=H+2p, Wp=W+2p.
    wt_ref: (K*K, W*C) per-tap depthwise weights, tiled W times along lanes.
    o_ref : (1, H, W*C) output slab.
    """
    xp = xp_ref[0]                                   # (Hp, Wp*C), load once
    acc = jnp.zeros((H, W * C), jnp.float32)
    for i in range(K):                               # 9 static taps, unrolled
        for j in range(K):
            tap = xp[dil * i: dil * i + H,
                     dil * j * C: dil * j * C + W * C]          # (H, W*C)
            acc = acc + tap * wt_ref[i * K + j: i * K + j + 1, :]  # bcast rows
    o_ref[0] = acc


def fast_coverage_conv(x, weight, *, kernel_size=3, dilation=2):
    """x: (B, C, H, W) float32; weight: (C, 1, K, K) torch Conv2d layout."""
    B, C, H, W = x.shape
    K = kernel_size
    assert weight.shape == (C, 1, K, K), weight.shape
    # TODO(synk): only depthwise multiplier 1 (out_channels == in_channels)
    # is implemented; groups=C with out_channels = m*C (m > 1) is not.
    pad = K // 2 + dilation - 1                      # = 2 for K=3, dilation=2
    Hp, Wp = H + 2 * pad, W + 2 * pad

    # Layout plumbing in the wrapper: NCHW -> NHWC, spatial zero-pad once,
    # flatten (W, C) into the lane axis so the kernel sees lane-dense slabs.
    x_cl = jnp.transpose(x, (0, 2, 3, 1))                        # (B, H, W, C)
    xp = jnp.pad(x_cl, ((0, 0), (pad, pad), (pad, pad), (0, 0)))  # (B,Hp,Wp,C)
    xp2 = xp.reshape(B, Hp, Wp * C)

    # Per-tap weight rows: (C, 1, K, K) -> (K, K, C) -> tile W times -> (K*K, W*C)
    w_t = jnp.transpose(weight[:, 0], (1, 2, 0))                 # (K, K, C)
    wt = jnp.broadcast_to(w_t.reshape(K * K, 1, C),
                          (K * K, W, C)).reshape(K * K, W * C)

    kernel = functools.partial(_fast_coverage_kernel,
                               H=H, W=W, C=C, K=K, dil=dilation)
    out2 = pl.pallas_call(
        kernel,
        out_shape=jax.ShapeDtypeStruct((B, H, W * C), jnp.float32),
        grid=(B,),
        in_specs=[
            pl.BlockSpec((1, Hp, Wp * C), lambda b: (b, 0, 0)),
            pl.BlockSpec((K * K, W * C), lambda b: (0, 0)),
        ],
        out_specs=pl.BlockSpec((1, H, W * C), lambda b: (b, 0, 0)),
        compiler_params=pltpu.CompilerParams(
            dimension_semantics=("parallel",)),
    )(xp2, wt)

    # Back to the module's NCHW output layout.
    return jnp.transpose(out2.reshape(B, H, W, C), (0, 3, 1, 2))


if __name__ == "__main__":
    B, C, H, W = 2, 8, 16, 16          # W*C = 128 -> fully lane-dense stores

    key = jax.random.PRNGKey(0)
    kx, kw = jax.random.split(key, 2)
    x = jax.random.normal(kx, (B, C, H, W), jnp.float32)
    weight = jax.random.normal(kw, (C, 1, 3, 3), jnp.float32) * 0.1

    out = fast_coverage_conv(x, weight)
    jax.block_until_ready(out)

    # Pure-JAX reference: depthwise dilated conv identical to the torch module.
    ref = jax.lax.conv_general_dilated(
        x, weight, window_strides=(1, 1), padding=((2, 2), (2, 2)),
        rhs_dilation=(2, 2), dimension_numbers=("NCHW", "OIHW", "NCHW"),
        feature_group_count=C)

    assert out.shape == (B, C, H, W) and out.dtype == jnp.float32
    assert jnp.allclose(out, ref, rtol=1e-5, atol=1e-5), \
        float(jnp.max(jnp.abs(out - ref)))
    print("KERNEL_OK")
</pallas_src>

<mosaic_0001>
module attributes {stable_mosaic.version = 11 : i64} {
  func.func @_fast_coverage_kernel(%arg0: i32, %arg1: memref<1x20x160xf32, #tpu.memory_space<vmem>>, %arg2: memref<9x128xf32, #tpu.memory_space<vmem>>, %arg3: memref<1x16x128xf32, #tpu.memory_space<vmem>>) attributes {dimension_semantics = [#tpu.dimension_semantics<parallel>], iteration_bounds = array<i64: 2>, scalar_prefetch = 0 : i64, scratch_operands = 0 : i64, tpu.core_type = #tpu.core_type<tc>, window_params = [{transform_indices = @transform_0, window_bounds = array<i64: 1, 20, 160>}, {pipeline_mode = #tpu.pipeline_mode<synchronous>, transform_indices = @transform_1, window_bounds = array<i64: 9, 128>}, {transform_indices = @transform_2, window_bounds = array<i64: 1, 16, 128>}]} {
    %c0 = arith.constant 0 : index
    %c0_0 = arith.constant 0 : index
    %c0_1 = arith.constant 0 : index
    %0 = vector.load %arg1[%c0, %c0_0, %c0_1] : memref<1x20x160xf32, #tpu.memory_space<vmem>>, vector<1x20x160xf32>
    %1 = vector.shape_cast %0 : vector<1x20x160xf32> to vector<20x160xf32>
    %cst = arith.constant 0.000000e+00 : f32
    %2 = vector.broadcast %cst : f32 to vector<16x128xf32>
    %3 = vector.extract_strided_slice %1 {offsets = [0, 0], sizes = [16, 128], strides = [1, 1]} : vector<20x160xf32> to vector<16x128xf32>
    %c0_2 = arith.constant 0 : index
    %c0_3 = arith.constant 0 : index
    %4 = vector.load %arg2[%c0_2, %c0_3] : memref<9x128xf32, #tpu.memory_space<vmem>>, vector<1x128xf32>
    %5 = vector.broadcast %4 : vector<1x128xf32> to vector<16x128xf32>
    %6 = arith.mulf %3, %5 : vector<16x128xf32>
    %7 = arith.addf %2, %6 : vector<16x128xf32>
    %8 = vector.extract_strided_slice %1 {offsets = [0, 16], sizes = [16, 128], strides = [1, 1]} : vector<20x160xf32> to vector<16x128xf32>
    %c1 = arith.constant 1 : index
    %c0_4 = arith.constant 0 : index
    %9 = vector.load %arg2[%c1, %c0_4] : memref<9x128xf32, #tpu.memory_space<vmem>>, vector<1x128xf32>
    %10 = vector.broadcast %9 : vector<1x128xf32> to vector<16x128xf32>
    %11 = arith.mulf %8, %10 : vector<16x128xf32>
    %12 = arith.addf %7, %11 : vector<16x128xf32>
    %13 = vector.extract_strided_slice %1 {offsets = [0, 32], sizes = [16, 128], strides = [1, 1]} : vector<20x160xf32> to vector<16x128xf32>
    %c2 = arith.constant 2 : index
    %c0_5 = arith.constant 0 : index
    %14 = vector.load %arg2[%c2, %c0_5] : memref<9x128xf32, #tpu.memory_space<vmem>>, vector<1x128xf32>
    %15 = vector.broadcast %14 : vector<1x128xf32> to vector<16x128xf32>
    %16 = arith.mulf %13, %15 : vector<16x128xf32>
    %17 = arith.addf %12, %16 : vector<16x128xf32>
    %18 = vector.extract_strided_slice %1 {offsets = [2, 0], sizes = [16, 128], strides = [1, 1]} : vector<20x160xf32> to vector<16x128xf32>
    %c3 = arith.constant 3 : index
    %c0_6 = arith.constant 0 : index
    %19 = vector.load %arg2[%c3, %c0_6] : memref<9x128xf32, #tpu.memory_space<vmem>>, vector<1x128xf32>
    %20 = vector.broadcast %19 : vector<1x128xf32> to vector<16x128xf32>
    %21 = arith.mulf %18, %20 : vector<16x128xf32>
    %22 = arith.addf %17, %21 : vector<16x128xf32>
    %23 = vector.extract_strided_slice %1 {offsets = [2, 16], sizes = [16, 128], strides = [1, 1]} : vector<20x160xf32> to vector<16x128xf32>
    %c4 = arith.constant 4 : index
    %c0_7 = arith.constant 0 : index
    %24 = vector.load %arg2[%c4, %c0_7] : memref<9x128xf32, #tpu.memory_space<vmem>>, vector<1x128xf32>
    %25 = vector.broadcast %24 : vector<1x128xf32> to vector<16x128xf32>
    %26 = arith.mulf %23, %25 : vector<16x128xf32>
    %27 = arith.addf %22, %26 : vector<16x128xf32>
    %28 = vector.extract_strided_slice %1 {offsets = [2, 32], sizes = [16, 128], strides = [1, 1]} : vector<20x160xf32> to vector<16x128xf32>
    %c5 = arith.constant 5 : index
    %c0_8 = arith.constant 0 : index
    %29 = vector.load %arg2[%c5, %c0_8] : memref<9x128xf32, #tpu.memory_space<vmem>>, vector<1x128xf32>
    %30 = vector.broadcast %29 : vector<1x128xf32> to vector<16x128xf32>
    %31 = arith.mulf %28, %30 : vector<16x128xf32>
    %32 = arith.addf %27, %31 : vector<16x128xf32>
    %33 = vector.extract_strided_slice %1 {offsets = [4, 0], sizes = [16, 128], strides = [1, 1]} : vector<20x160xf32> to vector<16x128xf32>
    %c6 = arith.constant 6 : index
    %c0_9 = arith.constant 0 : index
    %34 = vector.load %arg2[%c6, %c0_9] : memref<9x128xf32, #tpu.memory_space<vmem>>, vector<1x128xf32>
    %35 = vector.broadcast %34 : vector<1x128xf32> to vector<16x128xf32>
    %36 = arith.mulf %33, %35 : vector<16x128xf32>
    %37 = arith.addf %32, %36 : vector<16x128xf32>
    %38 = vector.extract_strided_slice %1 {offsets = [4, 16], sizes = [16, 128], strides = [1, 1]} : vector<20x160xf32> to vector<16x128xf32>
    %c7 = arith.constant 7 : index
    %c0_10 = arith.constant 0 : index
    %39 = vector.load %arg2[%c7, %c0_10] : memref<9x128xf32, #tpu.memory_space<vmem>>, vector<1x128xf32>
    %40 = vector.broadcast %39 : vector<1x128xf32> to vector<16x128xf32>
    %41 = arith.mulf %38, %40 : vector<16x128xf32>
    %42 = arith.addf %37, %41 : vector<16x128xf32>
    %43 = vector.extract_strided_slice %1 {offsets = [4, 32], sizes = [16, 128], strides = [1, 1]} : vector<20x160xf32> to vector<16x128xf32>
    %c8 = arith.constant 8 : index
    %c0_11 = arith.constant 0 : index
    %44 = vector.load %arg2[%c8, %c0_11] : memref<9x128xf32, #tpu.memory_space<vmem>>, vector<1x128xf32>
    %45 = vector.broadcast %44 : vector<1x128xf32> to vector<16x128xf32>
    %46 = arith.mulf %43, %45 : vector<16x128xf32>
    %47 = arith.addf %42, %46 : vector<16x128xf32>
    %c0_12 = arith.constant 0 : index
    %c0_13 = arith.constant 0 : index
    %c0_14 = arith.constant 0 : index
    %48 = vector.load %arg3[%c0_12, %c0_13, %c0_14] : memref<1x16x128xf32, #tpu.memory_space<vmem>>, vector<1x16x128xf32>
    %49 = vector.shape_cast %48 : vector<1x16x128xf32> to vector<16x128xf32>
    %50 = vector.shape_cast %47 : vector<16x128xf32> to vector<1x16x128xf32>
    tpu.vector_store %arg3[%c0_12, %c0_13, %c0_14], %50 {strides = array<i32>} : memref<1x16x128xf32, #tpu.memory_space<vmem>>, vector<1x16x128xf32>,
    return
  }
  func.func @transform_0(%arg0: i32) -> (i32, i32, i32) {
    %c0_i32 = arith.constant 0 : i32
    %c0_i32_0 = arith.constant 0 : i32
    %c0_i32_1 = arith.constant 0 : i32
    return %arg0, %c0_i32, %c0_i32_0 : i32, i32, i32
  }
  func.func @transform_1(%arg0: i32) -> (i32, i32) {
    %c0_i32 = arith.constant 0 : i32
    %c0_i32_0 = arith.constant 0 : i32
    %c0_i32_1 = arith.constant 0 : i32
    return %c0_i32, %c0_i32_0 : i32, i32
  }
  func.func @transform_2(%arg0: i32) -> (i32, i32, i32) {
    %c0_i32 = arith.constant 0 : i32
    %c0_i32_0 = arith.constant 0 : i32
    %c0_i32_1 = arith.constant 0 : i32
    return %arg0, %c0_i32, %c0_i32_0 : i32, i32, i32
  }
}

</mosaic_0001>

<llo_original>
// kernel: tpu_custom_call.1
$region0: #{tpu_custom_call.1}
  #allocation0 [shape = 'u32[]', space=smem, size = 0x4, offset = 0x4, fixed_abs, tag = 'smem constant byte address 0x4 - core index']
  #allocation1 [shape = 'u32[144,128]{1,0:T(1,128)}', space=vmem, size = 0x12000, scoped, tag = 'internal scratch']
  %s0 = inlined_call_operand.vmem [shape: f32[2,20,160], index: 0, kind: input, shape index: {}]
  %s1 = inlined_call_operand.vmem [shape: f32[9,128], index: 1, kind: input, shape index: {}]
  %s2 = inlined_call_operand.hbm [shape: f32[2,16,128], index: 2, kind: output, shape index: {}]
  %s3 = sld [smem:[#allocation0]]
  $region41: #{tpu_custom_call.1} parent=0
    _
  %s5 = ssub.s32 1, %s3
  %s6 = scalar_select 0, %s5, %s3
  $region1: #{tpu_custom_call.1} parent=0
    #allocation2 [shape = 'u8[16384]{0}', space=vmem, size = 0x4000, scoped, tag = 'output window, operand 0']
    #allocation3 [shape = 's32[2]{0}', space=sflag, size = 0x8, scoped, tag = 'scoped memory for tpu_custom_call.1']
    %7 = vsyncpa [#allocation3], 0
    %s8 = scalar_lea.sflag [#allocation3], 1
    %9 = vsyncpa %s8, 0
    loop: start=0, step=1, limit=4
    $region2: #{tpu_custom_call.1} parent=1 // loop_pre_header
      _
    $region3: #{tpu_custom_call.1} parent=1 // loop_header
      %s11 = sphi 0, %s15
      %p12 = scmp.ge.s32.totalorder %s11, 4
      %s21 = sphi 0, %s23
      %s24 = sphi 0, %s21
      %s25 = sphi 0, %s24
      %s41 = sphi 0, %s25
      %s45 = sphi 0, %s45
      %s47 = sphi 0, %s45
      %s48 = sphi 0, %s47
      %s62 = sphi 0, %s48
      %s68 = sphi 0, %s70
      %s71 = sphi 0, %s68
      %s72 = sphi 0, %s71
      %s88 = sphi 0, %s72
    $region4: #{tpu_custom_call.1} parent=1 // loop_header_branch
      %14 = sbr.rel (%p12) target = $region8
    $region5: #{tpu_custom_call.1} parent=1 // loop_body
      %s16 = ssub.s32 %s11, 1
      %s17 = ssub.s32 %s11, 2
      %s18 = sadd.s32 %s11, 1
      %s19 = ssub.s32 %s11, %s18
      %p20 = scmp.eq.s32.totalorder %s19, 0
      %s22 = sadd.s32 %s21, 1
      %s23 = scalar_select %p20, %s21, %s22
      %p26 = pneg %p20
      %p27 = scmp.eq.s32.totalorder %s11, 1
      %p28 = por %p26, %p27
      %p29 = scmp.ne.s32.totalorder %s21, %s24
      %p30 = scmp.eq.s32.totalorder %s11, 0
      %p31 = por %p29, %p30
      %p32 = scmp.ne.s32.totalorder %s21, %s24
      %p33 = scmp.eq.s32.totalorder %s16, 1
      %p34 = por %p32, %p33
      %p35 = scmp.ne.s32.totalorder %s24, %s25
      %p36 = scmp.eq.s32.totalorder %s16, 0
      %p37 = por %p35, %p36
      %p38 = scmp.ne.s32.totalorder %s24, %s25
      %p39 = scmp.eq.s32.totalorder %s17, 1
      %p40 = por %p38, %p39
      %p42 = scmp.ne.s32.totalorder %s25, %s41
      %p43 = scmp.eq.s32.totalorder %s17, 0
      %p44 = por %p42, %p43
      %s46 = sadd.s32 %s45, 1
      %p49 = scmp.eq.s32.totalorder %s11, 1
      %p50 = scmp.ne.s32.totalorder %s45, %s47
      %p51 = scmp.eq.s32.totalorder %s11, 0
      %p52 = por %p50, %p51
      %p53 = scmp.ne.s32.totalorder %s45, %s47
      %p54 = scmp.eq.s32.totalorder %s16, 1
      %p55 = por %p53, %p54
      %p56 = scmp.ne.s32.totalorder %s47, %s48
      %p57 = scmp.eq.s32.totalorder %s16, 0
      %p58 = por %p56, %p57
      %p59 = scmp.ne.s32.totalorder %s47, %s48
      %p60 = scmp.eq.s32.totalorder %s17, 1
      %p61 = por %p59, %p60
      %p63 = scmp.ne.s32.totalorder %s48, %s62
      %p64 = scmp.eq.s32.totalorder %s17, 0
      %p65 = por %p63, %p64
      %s66 = ssub.s32 %s11, %s18
      %p67 = scmp.eq.s32.totalorder %s66, 0
      %s69 = sadd.s32 %s68, 1
      %s70 = scalar_select %p67, %s68, %s69
      %p73 = pneg %p67
      %p74 = scmp.eq.s32.totalorder %s11, 1
      %p75 = por %p73, %p74
      %p76 = scmp.ne.s32.totalorder %s68, %s71
      %p77 = scmp.eq.s32.totalorder %s11, 0
      %p78 = por %p76, %p77
      %p79 = scmp.ne.s32.totalorder %s68, %s71
      %p80 = scmp.eq.s32.totalorder %s16, 1
      %p81 = por %p79, %p80
      %p82 = scmp.ne.s32.totalorder %s71, %s72
      %p83 = scmp.eq.s32.totalorder %s16, 0
      %p84 = por %p82, %p83
      %p85 = scmp.ne.s32.totalorder %s71, %s72
      %p86 = scmp.eq.s32.totalorder %s17, 1
      %p87 = por %p85, %p86
      %p89 = scmp.ne.s32.totalorder %s72, %s88
      %p90 = scmp.eq.s32.totalorder %s17, 0
      %p91 = por %p89, %p90
      %p92 = scmp.le.s32.totalorder 1, %s11
      %p93 = scmp.lt.s32.totalorder %s11, 3
      %p94 = pnand %p92, %p93
      %p95 = pneg %p94
      // Predicated region
      $region9: #{tpu_custom_call.1} parent=5 // pred_check
        _
      $region10: #{tpu_custom_call.1} parent=5 // pred_check_branch
        %97 = sbr.rel (%p94) target = $region12
      $region11: #{tpu_custom_call.1} parent=5 // pred_region
        %s98 = ssub.s32 %s11, 1
        // Predicated region
        $region13: #{tpu_custom_call.1} parent=11 // pred_check
          %p99 = pneg %p58
        $region14: #{tpu_custom_call.1} parent=11 // pred_check_branch
          %101 = sbr.rel (%p99) target = $region16
        $region15: #{tpu_custom_call.1} parent=11 // pred_region
          _
        $region16: #{tpu_custom_call.1} parent=11 // pred_fallthru
          _
      $region12: #{tpu_custom_call.1} parent=5 // pred_fallthru
        _
      %p102 = scmp.lt.s32.totalorder %s11, 2
      // Predicated region
      $region17: #{tpu_custom_call.1} parent=5 // pred_check
        %p103 = pneg %p102
      $region18: #{tpu_custom_call.1} parent=5 // pred_check_branch
        %105 = sbr.rel (%p103) target = $region20
      $region19: #{tpu_custom_call.1} parent=5 // pred_region
        // Predicated region
        $region21: #{tpu_custom_call.1} parent=19 // pred_check
          %p106 = pneg %p31
        $region22: #{tpu_custom_call.1} parent=19 // pred_check_branch
          %108 = sbr.rel (%p106) target = $region24
        $region23: #{tpu_custom_call.1} parent=19 // pred_region
          %p109 = scmp.lt.s32.totalorder %s11, 1
          %s110 = scalar_select %p109, %s11, 1
          %s111 = smul.addr %s110, 6
          %s112 = smul.addr %s111, 8
          %s113 = scalar_lea.vmem %s0, %s112
        $region24: #{tpu_custom_call.1} parent=19 // pred_fallthru
          _
      $region20: #{tpu_custom_call.1} parent=5 // pred_fallthru
        _
      %p114 = scmp.le.s32.totalorder 1, %s11
      %p115 = scmp.lt.s32.totalorder %s11, 3
      %p116 = pnand %p114, %p115
      %p117 = pneg %p116
      // Predicated region
      $region25: #{tpu_custom_call.1} parent=5 // pred_check
        _
      $region26: #{tpu_custom_call.1} parent=5 // pred_check_branch
        %119 = sbr.rel (%p116) target = $region28
      $region27: #{tpu_custom_call.1} parent=5 // pred_region
        %s120 = ssub.s32 %s11, 1
        %p121 = scmp.lt.s32.totalorder %s16, 1
        %s122 = scalar_select %p121, %s16, 1
        %s123 = smul.addr %s122, 6
        %s124 = smul.addr %s123, 8
        %s125 = scalar_lea.vmem %s0, %s124
        %p126 = pneg %p37
        %p127 = pneg %p34
        %p128 = pneg %p58
        %p129 = pneg %p55
        %p130 = pneg %p84
        %p131 = pneg %p81
        %s132 = sand.u32 %s71, 1
        %s133 = scalar_lea.sflag [#allocation3], %s132
        %s134 = sand.u32 %s71, 1
        %s135 = smul.addr %s134, 16
        %s136 = scalar_lea.vmem [#allocation2], %s135
        %p137 = scmp.lt.s32.totalorder %s16, 1
        %s138 = scalar_select %p137, %s16, 1
        %s139 = smul.addr %s138, 6
        %s140 = smul.addr %s139, 8
        %s141 = scalar_lea.vmem %s0, %s140
        %v142 = vld [vmem:[%s141] sm:$0xff]
        %v143 = vld [vmem:[%s141 + $0x8] sm:$0xff]
        %v144 = vld [vmem:[%s141 + $0x10] sm:$0xff]
        %v145 = vld [vmem:[%s141 + $0x18] sm:$0xff]
        %v146 = vld [vmem:[%s141 + $0x20] sm:$0xf]
        %v147 = vld [vmem:[%s141 + $0x28] sm:$0xf]
        %v148 = vld [vmem:[%s1] sm:$0x1]
        %v149 = vlaneseq
        %v150 = vshrl.u32 %v149, 7
        %v151 = vsub.s32 0, %v150
        %v152 = vrot.slane %v148, %v151
        %v153 = vmul.f32 %v142, %v152
        %v154 = vmul.f32 %v144, %v152
        %v155 = vadd.f32 %v153, 0.0
        %v156 = vadd.f32 %v154, 0.0
        %v157 = vld [vmem:[%s1 + $0x1] sm:$0x1]
        %v158 = vlaneseq
        %v159 = vshrl.u32 %v158, 7
        %v160 = vsub.s32 0, %v159
        %v161 = vrot.slane %v157, %v160
        %163 = vrot.lane.b32.xlu0 %v161, 16
        %v164 = vpop.permute.xlu0 %163
        %v166 = vmul.f32 %v142, %v164
        %v167 = vmul.f32 %v143, %v164
        %v168 = vmul.f32 %v144, %v164
        %v169 = vmul.f32 %v145, %v164
        %174 = vrot.lane.b32.xlu0 %v166, 112
        %v175 = vpop.permute.xlu0 %174
        %176 = vrot.lane.b32.xlu0 %v167, 112
        %v177 = vpop.permute.xlu0 %176
        %178 = vrot.lane.b32.xlu0 %v168, 112
        %v179 = vpop.permute.xlu0 %178
        %180 = vrot.lane.b32.xlu0 %v169, 112
        %v181 = vpop.permute.xlu0 %180
        %vm182 = vcmask 916480
        %v183 = vsel %vm182, %v175, %v177
        %v184 = vsel %vm182, %v179, %v181
        %v187 = vadd.f32 %v155, %v183
        %v188 = vadd.f32 %v156, %v184
        %v189 = vld [vmem:[%s1 + $0x2] sm:$0x1]
        %v190 = vlaneseq
        %v191 = vshrl.u32 %v190, 7
        %v192 = vsub.s32 0, %v191
        %v193 = vrot.slane %v189, %v192
        %195 = vrot.lane.b32.xlu0 %v193, 32
        %v196 = vpop.permute.xlu0 %195
        %v198 = vmul.f32 %v142, %v196
        %v199 = vmul.f32 %v143, %v196
        %v200 = vmul.f32 %v144, %v196
        %v201 = vmul.f32 %v145, %v196
        %206 = vrot.lane.b32.xlu0 %v198, 96
        %v207 = vpop.permute.xlu0 %206
        %208 = vrot.lane.b32.xlu0 %v199, 96
        %v209 = vpop.permute.xlu0 %208
        %210 = vrot.lane.b32.xlu0 %v200, 96
        %v211 = vpop.permute.xlu0 %210
        %212 = vrot.lane.b32.xlu0 %v201, 96
        %v213 = vpop.permute.xlu0 %212
        %vm214 = vcmask 785408
        %v215 = vsel %vm214, %v207, %v209
        %v216 = vsel %vm214, %v211, %v213
        %v219 = vadd.f32 %v187, %v215
        %v220 = vadd.f32 %v188, %v216
        %v221 = vld [vmem:[%s1 + $0x3] sm:$0x1]
        %v222 = vlaneseq
        %v223 = vshrl.u32 %v222, 7
        %v224 = vsub.s32 0, %v223
        %v225 = vrot.slane %v221, %v224
        %v226 = vmul.f32 %v142, %v225
        %v227 = vmul.f32 %v144, %v225
        %v228 = vmul.f32 %v146, %v225
        %vm232 = vcmask 1045504
        %v233 = vrot.slane %v226, 2
        %v234 = vrot.slane %v227, 2
        %v235 = vsel %vm232, %v233, %v234
        %v236 = vrot.slane %v228, 2
        %v237 = vsel %vm232, %v234, %v236
        %v240 = vadd.f32 %v219, %v235
        %v241 = vadd.f32 %v220, %v237
        %v242 = vld [vmem:[%s1 + $0x4] sm:$0x1]
        %v243 = vlaneseq
        %v244 = vshrl.u32 %v243, 7
        %v245 = vsub.s32 0, %v244
        %v246 = vrot.slane %v242, %v245
        %248 = vrot.lane.b32.xlu0 %v246, 16
        %v249 = vpop.permute.xlu0 %248
        %v251 = vmul.f32 %v142, %v249
        %v252 = vmul.f32 %v143, %v249
        %v253 = vmul.f32 %v144, %v249
        %v254 = vmul.f32 %v145, %v249
        %v255 = vmul.f32 %v146, %v249
        %v256 = vmul.f32 %v147, %v249
        %v263 = vrot.slane %v251, 2
        %v264 = vrot.slane %v253, 2
        %v265 = vsel %vm232, %v263, %v264
        %v266 = vrot.slane %v252, 2
        %v267 = vrot.slane %v254, 2
        %v268 = vsel %vm232, %v266, %v267
        %v269 = vrot.slane %v255, 2
        %v270 = vsel %vm232, %v264, %v269
        %v271 = vrot.slane %v256, 2
        %v272 = vsel %vm232, %v267, %v271
        %273 = vrot.lane.b32.xlu0 %v265, 112
        %v274 = vpop.permute.xlu0 %273
        %275 = vrot.lane.b32.xlu0 %v268, 112
        %v276 = vpop.permute.xlu0 %275
        %277 = vrot.lane.b32.xlu0 %v270, 112
        %v278 = vpop.permute.xlu0 %277
        %279 = vrot.lane.b32.xlu0 %v272, 112
        %v280 = vpop.permute.xlu0 %279
        %v281 = vsel %vm182, %v274, %v276
        %v282 = vsel %vm182, %v278, %v280
        %v285 = vadd.f32 %v240, %v281
        %v286 = vadd.f32 %v241, %v282
        %v287 = vld [vmem:[%s1 + $0x5] sm:$0x1]
        %v288 = vlaneseq
        %v289 = vshrl.u32 %v288, 7
        %v290 = vsub.s32 0, %v289
        %v291 = vrot.slane %v287, %v290
        %293 = vrot.lane.b32.xlu0 %v291, 32
        %v294 = vpop.permute.xlu0 %293
        %v296 = vmul.f32 %v142, %v294
        %v297 = vmul.f32 %v143, %v294
        %v298 = vmul.f32 %v144, %v294
        %v299 = vmul.f32 %v145, %v294
        %v300 = vmul.f32 %v146, %v294
        %v301 = vmul.f32 %v147, %v294
        %v308 = vrot.slane %v296, 2
        %v309 = vrot.slane %v298, 2
        %v310 = vsel %vm232, %v308, %v309
        %v311 = vrot.slane %v297, 2
        %v312 = vrot.slane %v299, 2
        %v313 = vsel %vm232, %v311, %v312
        %v314 = vrot.slane %v300, 2
        %v315 = vsel %vm232, %v309, %v314
        %v316 = vrot.slane %v301, 2
        %v317 = vsel %vm232, %v312, %v316
        %318 = vrot.lane.b32.xlu0 %v310, 96
        %v319 = vpop.permute.xlu0 %318
        %320 = vrot.lane.b32.xlu0 %v313, 96
        %v321 = vpop.permute.xlu0 %320
        %322 = vrot.lane.b32.xlu0 %v315, 96
        %v323 = vpop.permute.xlu0 %322
        %324 = vrot.lane.b32.xlu0 %v317, 96
        %v325 = vpop.permute.xlu0 %324
        %v326 = vsel %vm214, %v319, %v321
        %v327 = vsel %vm214, %v323, %v325
        %v330 = vadd.f32 %v285, %v326
        %v331 = vadd.f32 %v286, %v327
        %v332 = vld [vmem:[%s1 + $0x6] sm:$0x1]
        %v333 = vlaneseq
        %v334 = vshrl.u32 %v333, 7
        %v335 = vsub.s32 0, %v334
        %v336 = vrot.slane %v332, %v335
        %v337 = vmul.f32 %v142, %v336
        %v338 = vmul.f32 %v144, %v336
        %v339 = vmul.f32 %v146, %v336
        %vm343 = vcmask 1043456
        %v344 = vrot.slane %v337, 4
        %v345 = vrot.slane %v338, 4
        %v346 = vsel %vm343, %v344, %v345
        %v347 = vrot.slane %v339, 4
        %v348 = vsel %vm343, %v345, %v347
        %v351 = vadd.f32 %v330, %v346
        %v352 = vadd.f32 %v331, %v348
        %v353 = vld [vmem:[%s1 + $0x7] sm:$0x1]
        %v354 = vlaneseq
        %v355 = vshrl.u32 %v354, 7
        %v356 = vsub.s32 0, %v355
        %v357 = vrot.slane %v353, %v356
        %359 = vrot.lane.b32.xlu0 %v357, 16
        %v360 = vpop.permute.xlu0 %359
        %v362 = vmul.f32 %v142, %v360
        %v363 = vmul.f32 %v143, %v360
        %v364 = vmul.f32 %v144, %v360
        %v365 = vmul.f32 %v145, %v360
        %v366 = vmul.f32 %v146, %v360
        %v367 = vmul.f32 %v147, %v360
        %v374 = vrot.slane %v362, 4
        %v375 = vrot.slane %v364, 4
        %v376 = vsel %vm343, %v374, %v375
        %v377 = vrot.slane %v363, 4
        %v378 = vrot.slane %v365, 4
        %v379 = vsel %vm343, %v377, %v378
        %v380 = vrot.slane %v366, 4
        %v381 = vsel %vm343, %v375, %v380
        %v382 = vrot.slane %v367, 4
        %v383 = vsel %vm343, %v378, %v382
        %384 = vrot.lane.b32.xlu0 %v376, 112
        %v385 = vpop.permute.xlu0 %384
        %386 = vrot.lane.b32.xlu0 %v379, 112
        %v387 = vpop.permute.xlu0 %386
        %388 = vrot.lane.b32.xlu0 %v381, 112
        %v389 = vpop.permute.xlu0 %388
        %390 = vrot.lane.b32.xlu0 %v383, 112
        %v391 = vpop.permute.xlu0 %390
        %v392 = vsel %vm182, %v385, %v387
        %v393 = vsel %vm182, %v389, %v391
        %v396 = vadd.f32 %v351, %v392
        %v397 = vadd.f32 %v352, %v393
        %v398 = vld [vmem:[%s1 + $0x8] sm:$0x1]
        %v399 = vlaneseq
        %v400 = vshrl.u32 %v399, 7
        %v401 = vsub.s32 0, %v400
        %v402 = vrot.slane %v398, %v401
        %404 = vrot.lane.b32.xlu0 %v402, 32
        %v405 = vpop.permute.xlu0 %404
        %v407 = vmul.f32 %v142, %v405
        %v408 = vmul.f32 %v143, %v405
        %v409 = vmul.f32 %v144, %v405
        %v410 = vmul.f32 %v145, %v405
        %v411 = vmul.f32 %v146, %v405
        %v412 = vmul.f32 %v147, %v405
        %v419 = vrot.slane %v407, 4
        %v420 = vrot.slane %v409, 4
        %v421 = vsel %vm343, %v419, %v420
        %v422 = vrot.slane %v408, 4
        %v423 = vrot.slane %v410, 4
        %v424 = vsel %vm343, %v422, %v423
        %v425 = vrot.slane %v411, 4
        %v426 = vsel %vm343, %v420, %v425
        %v427 = vrot.slane %v412, 4
        %v428 = vsel %vm343, %v423, %v427
        %429 = vrot.lane.b32.xlu0 %v421, 96
        %v430 = vpop.permute.xlu0 %429
        %431 = vrot.lane.b32.xlu0 %v424, 96
        %v432 = vpop.permute.xlu0 %431
        %433 = vrot.lane.b32.xlu0 %v426, 96
        %v434 = vpop.permute.xlu0 %433
        %435 = vrot.lane.b32.xlu0 %v428, 96
        %v436 = vpop.permute.xlu0 %435
        %v437 = vsel %vm214, %v430, %v432
        %v438 = vsel %vm214, %v434, %v436
        %v441 = vadd.f32 %v396, %v437
        %v442 = vadd.f32 %v397, %v438
        %443 = vst [vmem:[%s136] sm:$0xff] %v441
        %444 = vst [vmem:[%s136 + $0x8] sm:$0xff] %v442
        %s445 = sand.u32 %s71, 1
        %s446 = scalar_lea.sflag [#allocation3], %s445
        %s447 = sand.u32 %s71, 1
        %s448 = smul.addr %s447, 16
        %s449 = scalar_lea.vmem [#allocation2], %s448
        // Predicated region
        $region29: #{tpu_custom_call.1} parent=27 // pred_check
          %p450 = pneg %p81
        $region30: #{tpu_custom_call.1} parent=27 // pred_check_branch
          %452 = sbr.rel (%p450) target = $region32
        $region31: #{tpu_custom_call.1} parent=27 // pred_region
          %s454 = ssub.s32 256, 256
          %455 = vsyncadd %s446, %s454
          %s456 = smul.addr %s16, 2
          %s457 = smul.addr %s456, 128
          %s458 = scalar_lea.hbm %s2, %s457
          %s459 = sshll.u32 %s449, 4
          %s460 = int_to_ptr.vmem [resolvable:$true] %s459
          %465 = dma.vmem_to_hbm [thread:$0]  %s460, 256, %s458, %s446, 128, 128, 8
        $region32: #{tpu_custom_call.1} parent=27 // pred_fallthru
          _
      $region28: #{tpu_custom_call.1} parent=5 // pred_fallthru
        _
      %p466 = scmp.le.s32.totalorder 2, %s11
      // Predicated region
      $region33: #{tpu_custom_call.1} parent=5 // pred_check
        %p467 = pneg %p466
      $region34: #{tpu_custom_call.1} parent=5 // pred_check_branch
        %469 = sbr.rel (%p467) target = $region36
      $region35: #{tpu_custom_call.1} parent=5 // pred_region
        %s470 = ssub.s32 %s11, 2
        // Predicated region
        $region37: #{tpu_custom_call.1} parent=35 // pred_check
          %p471 = pneg %p87
        $region38: #{tpu_custom_call.1} parent=35 // pred_check_branch
          %473 = sbr.rel (%p471) target = $region40
        $region39: #{tpu_custom_call.1} parent=35 // pred_region
          %s474 = sand.u32 %s72, 1
          %s475 = scalar_lea.sflag [#allocation3], %s474
          %s476 = sand.u32 %s72, 1
          %s477 = smul.addr %s476, 16
          %s478 = scalar_lea.vmem [#allocation2], %s477
          %479 = dma.done %s475, 256
        $region40: #{tpu_custom_call.1} parent=35 // pred_fallthru
          _
      $region36: #{tpu_custom_call.1} parent=5 // pred_fallthru
        _
    $region6: #{tpu_custom_call.1} parent=1 // loop_footer
      %s15 = sadd.s32 1, %s11
    $region7: #{tpu_custom_call.1} parent=1 // loop_footer_branch
      %10 = sbr.rel target = $region3
    $region8: #{tpu_custom_call.1} parent=1 // loop_exit
      _
    %480 = vsyncpa [#allocation3], 1
    %s481 = scalar_lea.sflag [#allocation3], 1
    %482 = vsyncpa %s481, 1

</llo_original>
